<compile_context>
chip_gen: v7x
topology: tpu7x:2x2x1
jax: 0.10.0
libtpu: 0.0.40
codegen_flags: <defaults>
</compile_context>

<pallas_src>
import functools

import jax
import jax.numpy as jnp
from jax.experimental import pallas as pl
from jax.experimental.pallas import tpu as pltpu


def _lstm_fc_kernel(x_ref,        # (T*Bp, D)   bf16, time-major padded batch
                    wih0_ref,     # (D, 4H)     bf16
                    b0_ref,       # (1, 4H)     f32   b_ih0 + b_hh0
                    wwave_ref,    # (2H, 8H)    bf16  [[Whh0, Wih1],[0, Whh1]]
                    b1_ref,       # (1, 4H)     f32   b_ih1 + b_hh1
                    wfc_ref,      # (O, H)      f32   fc weight, row layout
                    bfc_ref,      # (1, O)      f32
                    out_ref,      # (Bp, O)     f32
                    *, seq_len):
    TB, _ = x_ref.shape
    T = seq_len
    BP = TB // T
    H4 = wih0_ref.shape[1]
    H = H4 // 4
    O = out_ref.shape[1]

    # ---- Read weights once; hoist the layer-1 bias broadcast out of the loop.
    w_wave = wwave_ref[...]                                    # (2H, 8H) bf16
    b1b = jnp.broadcast_to(b1_ref[...], (BP, H4))              # (Bp, 4H) f32

    # ---- Hoisted layer-0 input projection: ONE bf16 matmul for all steps,
    #      bias folded in once.  Stays f32 after accumulation.
    g0_all = (jnp.dot(x_ref[...], wih0_ref[...],
                      preferred_element_type=jnp.float32)
              + b0_ref[...])                                   # (T*Bp, 4H) f32

    def activate(g, c_prev):
        # Two full-width EUP passes, then cheap static lane slices (f32 math).
        sig = jax.nn.sigmoid(g)                                # (Bp, 4H)
        th = jnp.tanh(g)                                       # (Bp, 4H)
        i = sig[:, 0 * H:1 * H]
        f = sig[:, 1 * H:2 * H]
        gg = th[:, 2 * H:3 * H]
        o = sig[:, 3 * H:4 * H]
        c_new = f * c_prev + i * gg
        return o * jnp.tanh(c_new), c_new

    # ---- State carried as values (registers), not VMEM scratch.
    zeros = jnp.zeros((BP, H), jnp.float32)
    c0, h1, c1 = zeros, zeros, zeros

    # t = 0, layer 0: h0_{-1} == 0 so the recurrent contribution is zero.
    h0, c0 = activate(g0_all[0:BP, :], c0)

    # T is small & static -> unrolled wavefront recurrence (T fused matmuls).
    for t in range(T):
        # One fused matmul per wave step:
        #   [h0_t | h1_{t-1}] (Bp,2H) @ W_wave (2H,8H)
        #     cols [0,4H)  = h0_t @ Whh0                (layer-0 rec for t+1)
        #     cols [4H,8H) = h0_t @ Wih1 + h1_{t-1}@Whh1 (layer-1 gates for t)
        xh = jnp.concatenate([h0, h1], axis=-1).astype(jnp.bfloat16)
        fused = jnp.dot(xh, w_wave,
                        preferred_element_type=jnp.float32)   # (Bp, 8H) f32

        # Layer 1 at step t.
        h1, c1 = activate(fused[:, H4:] + b1b, c1)

        # Layer 0 at step t+1 (tile-aligned slice; skipped after last step).
        if t + 1 < T:
            row = (t + 1) * BP
            g0 = g0_all[row:row + BP, :] + fused[:, :H4]
            h0, c0 = activate(g0, c0)

    # ---- fc on the last-timestep output of the top LSTM layer.
    if O == 1:
        # Degenerate N=1 matmul -> VPU multiply + lane reduction instead.
        fc = jnp.sum(h1 * wfc_ref[...], axis=-1, keepdims=True)     # (Bp, 1)
    else:
        fc = jax.lax.dot_general(h1.astype(jnp.bfloat16),
                                 wfc_ref[...].astype(jnp.bfloat16),
                                 (((1,), (1,)), ((), ())),
                                 preferred_element_type=jnp.float32)
    out_ref[...] = fc + bfc_ref[...]


@jax.jit
def demand_forecast(x, wih0, whh0, b0, wih1, whh1, b1, wfc, bfc):
    """x: (B, T, D) batch_first input. Weights pre-transposed: wih* (K, 4H),
    whh* (H, 4H), b* (1, 4H) = b_ih + b_hh, wfc (H, O), bfc (1, O)."""
    B, T, D = x.shape
    H = whh0.shape[0]
    O = wfc.shape[1]
    BP = ((B + 7) // 8) * 8        # pad batch to 8 sublanes for aligned slices

    # ---- Layout plumbing in the XLA wrapper (not compute):
    # time-major padded 2-D view of x -> hoisted projection is one clean
    # matmul and every per-step slice is a whole (8,128) tile.
    xt = jnp.transpose(x, (1, 0, 2))                           # (T, B, D)
    if BP != B:
        xt = jnp.pad(xt, ((0, 0), (0, BP - B), (0, 0)))
    x2d = xt.reshape(T * BP, D).astype(jnp.bfloat16)           # (T*Bp, D)

    # Wavefront weight: [[Whh0, Wih1], [0, Whh1]]  -> (2H, 8H)
    w_wave = jnp.concatenate(
        [jnp.concatenate([whh0, wih1], axis=1),
         jnp.concatenate([jnp.zeros((H, 4 * H), jnp.float32), whh1], axis=1)],
        axis=0).astype(jnp.bfloat16)

    wih0_b = wih0.astype(jnp.bfloat16)
    wfc_t = jnp.transpose(wfc)                                 # (O, H) f32

    vmem = pl.BlockSpec(memory_space=pltpu.MemorySpace.VMEM)
    out = pl.pallas_call(
        functools.partial(_lstm_fc_kernel, seq_len=T),
        out_shape=jax.ShapeDtypeStruct((BP, O), jnp.float32),
        in_specs=[vmem] * 7,
        out_specs=vmem,
    )(x2d, wih0_b, b0, w_wave, b1, wfc_t, bfc)
    return out[:B]


def _init_params(key, input_dim, hidden_dim, output_dim):
    """Deterministic PyTorch-style uniform(-1/sqrt(H), 1/sqrt(H)) init."""
    H = hidden_dim
    bound = 1.0 / jnp.sqrt(jnp.float32(H))
    ks = jax.random.split(key, 10)

    def u(k, shape):
        return jax.random.uniform(k, shape, jnp.float32, -bound, bound)

    # PyTorch stores (4H, in) / (4H, H); we keep them transposed for the kernel.
    w_ih0 = u(ks[0], (input_dim, 4 * H))
    w_hh0 = u(ks[1], (H, 4 * H))
    b0 = u(ks[2], (1, 4 * H)) + u(ks[3], (1, 4 * H))   # b_ih + b_hh
    w_ih1 = u(ks[4], (H, 4 * H))
    w_hh1 = u(ks[5], (H, 4 * H))
    b1 = u(ks[6], (1, 4 * H)) + u(ks[7], (1, 4 * H))
    w_fc = u(ks[8], (H, output_dim))
    b_fc = u(ks[9], (1, output_dim))
    return w_ih0, w_hh0, b0, w_ih1, w_hh1, b1, w_fc, b_fc


def _reference_forward(x, wih0, whh0, b0, wih1, whh1, b1, wfc, bfc):
    """Pure-JAX f32 reference of the PyTorch forward for validation."""
    B, T, D = x.shape
    H = whh0.shape[0]

    def cell(x_t, h, c, wih, whh, b):
        g = x_t @ wih + h @ whh + b
        i = jax.nn.sigmoid(g[:, :H])
        f = jax.nn.sigmoid(g[:, H:2 * H])
        gg = jnp.tanh(g[:, 2 * H:3 * H])
        o = jax.nn.sigmoid(g[:, 3 * H:])
        c_new = f * c + i * gg
        return o * jnp.tanh(c_new), c_new

    h0 = c0 = h1 = c1 = jnp.zeros((B, H), jnp.float32)
    for t in range(T):
        h0, c0 = cell(x[:, t, :], h0, c0, wih0, whh0, b0)
        h1, c1 = cell(h0, h1, c1, wih1, whh1, b1)
    return h1 @ wfc + bfc


if __name__ == "__main__":
    B, T, D, H, O = 2, 8, 4, 32, 1   # batch, seq, input_dim, hidden_dim, output_dim

    key = jax.random.PRNGKey(0)
    k_x, k_p = jax.random.split(key)
    x = jax.random.normal(k_x, (B, T, D), jnp.float32)
    params = _init_params(k_p, D, H, O)

    out = demand_forecast(x, *params)
    out = jax.block_until_ready(out)

    ref = _reference_forward(x, *params)
    assert out.shape == (B, O)
    # bf16 matmul operands (f32 accumulation) -> tolerance loosened vs f32 ref.
    assert jnp.allclose(out, ref, atol=2e-2, rtol=2e-2), (out, ref)

    print("KERNEL_OK")
</pallas_src>

<mosaic_0001>
module attributes {stable_mosaic.version = 11 : i64} {
  func.func @_lstm_fc_kernel(%arg0: memref<64x4xbf16, #tpu.memory_space<vmem>>, %arg1: memref<4x128xbf16, #tpu.memory_space<vmem>>, %arg2: memref<1x128xf32, #tpu.memory_space<vmem>>, %arg3: memref<64x256xbf16, #tpu.memory_space<vmem>>, %arg4: memref<1x128xf32, #tpu.memory_space<vmem>>, %arg5: memref<1x32xf32, #tpu.memory_space<vmem>>, %arg6: memref<1x1xf32, #tpu.memory_space<vmem>>, %arg7: memref<8x1xf32, #tpu.memory_space<vmem>>) attributes {dimension_semantics = [], scalar_prefetch = 0 : i64, scratch_operands = 0 : i64, tpu.core_type = #tpu.core_type<tc>} {
    %c0 = arith.constant 0 : index
    %c0_0 = arith.constant 0 : index
    %0 = vector.load %arg3[%c0, %c0_0] : memref<64x256xbf16, #tpu.memory_space<vmem>>, vector<64x256xbf16>
    %c0_1 = arith.constant 0 : index
    %c0_2 = arith.constant 0 : index
    %1 = vector.load %arg4[%c0_1, %c0_2] : memref<1x128xf32, #tpu.memory_space<vmem>>, vector<1x128xf32>
    %2 = vector.shape_cast %1 : vector<1x128xf32> to vector<1x128xf32>
    %3 = vector.broadcast %2 : vector<1x128xf32> to vector<8x128xf32>
    %c0_3 = arith.constant 0 : index
    %c0_4 = arith.constant 0 : index
    %4 = vector.load %arg0[%c0_3, %c0_4] : memref<64x4xbf16, #tpu.memory_space<vmem>>, vector<64x4xbf16>
    %c0_5 = arith.constant 0 : index
    %c0_6 = arith.constant 0 : index
    %5 = vector.load %arg1[%c0_5, %c0_6] : memref<4x128xbf16, #tpu.memory_space<vmem>>, vector<4x128xbf16>
    %cst = arith.constant dense<0.000000e+00> : vector<64x128xf32>
    %6 = tpu.matmul %4, %5, %cst {dimension_numbers = #tpu.dot_dimension_numbers<[1], [0], [0], [1], [0, 0, 1, 1], [], []>} : vector<64x4xbf16>, vector<4x128xbf16>, vector<64x128xf32> -> vector<64x128xf32>
    %c0_7 = arith.constant 0 : index
    %c0_8 = arith.constant 0 : index
    %7 = vector.load %arg2[%c0_7, %c0_8] : memref<1x128xf32, #tpu.memory_space<vmem>>, vector<1x128xf32>
    %8 = vector.broadcast %7 : vector<1x128xf32> to vector<64x128xf32>
    %9 = arith.addf %6, %8 : vector<64x128xf32>
    %cst_9 = arith.constant 0.000000e+00 : f32
    %10 = vector.broadcast %cst_9 : f32 to vector<8x32xf32>
    %11 = vector.extract_strided_slice %9 {offsets = [0, 0], sizes = [8, 128], strides = [1, 1]} : vector<64x128xf32> to vector<8x128xf32>
    %12 = arith.negf %11 : vector<8x128xf32>
    %13 = math.exp %12 : vector<8x128xf32>
    %cst_10 = arith.constant 1.000000e+00 : f32
    %14 = vector.broadcast %cst_10 : f32 to vector<8x128xf32>
    %15 = arith.addf %14, %13 : vector<8x128xf32>
    %16 = arith.divf %14, %15 : vector<8x128xf32>
    %17 = math.tanh %11 : vector<8x128xf32>
    %18 = vector.extract_strided_slice %16 {offsets = [0, 0], sizes = [8, 32], strides = [1, 1]} : vector<8x128xf32> to vector<8x32xf32>
    %19 = vector.extract_strided_slice %16 {offsets = [0, 32], sizes = [8, 32], strides = [1, 1]} : vector<8x128xf32> to vector<8x32xf32>
    %20 = vector.extract_strided_slice %17 {offsets = [0, 64], sizes = [8, 32], strides = [1, 1]} : vector<8x128xf32> to vector<8x32xf32>
    %21 = vector.extract_strided_slice %16 {offsets = [0, 96], sizes = [8, 32], strides = [1, 1]} : vector<8x128xf32> to vector<8x32xf32>
    %22 = arith.mulf %19, %10 : vector<8x32xf32>
    %23 = arith.mulf %18, %20 : vector<8x32xf32>
    %24 = arith.addf %22, %23 : vector<8x32xf32>
    %25 = math.tanh %24 : vector<8x32xf32>
    %26 = arith.mulf %21, %25 : vector<8x32xf32>
    %27 = tpu.concatenate %26, %10 in 1 : vector<8x32xf32>, vector<8x32xf32> -> vector<8x64xf32>
    %28 = arith.truncf %27 : vector<8x64xf32> to vector<8x64xbf16>
    %cst_11 = arith.constant dense<0.000000e+00> : vector<8x256xf32>
    %29 = tpu.matmul %28, %0, %cst_11 {dimension_numbers = #tpu.dot_dimension_numbers<[1], [0], [0], [1], [0, 0, 1, 1], [], []>} : vector<8x64xbf16>, vector<64x256xbf16>, vector<8x256xf32> -> vector<8x256xf32>
    %30 = vector.extract_strided_slice %29 {offsets = [0, 128], sizes = [8, 128], strides = [1, 1]} : vector<8x256xf32> to vector<8x128xf32>
    %31 = arith.addf %30, %3 : vector<8x128xf32>
    %32 = arith.negf %31 : vector<8x128xf32>
    %33 = math.exp %32 : vector<8x128xf32>
    %cst_12 = arith.constant 1.000000e+00 : f32
    %34 = vector.broadcast %cst_12 : f32 to vector<8x128xf32>
    %35 = arith.addf %34, %33 : vector<8x128xf32>
    %36 = arith.divf %34, %35 : vector<8x128xf32>
    %37 = math.tanh %31 : vector<8x128xf32>
    %38 = vector.extract_strided_slice %36 {offsets = [0, 0], sizes = [8, 32], strides = [1, 1]} : vector<8x128xf32> to vector<8x32xf32>
    %39 = vector.extract_strided_slice %36 {offsets = [0, 32], sizes = [8, 32], strides = [1, 1]} : vector<8x128xf32> to vector<8x32xf32>
    %40 = vector.extract_strided_slice %37 {offsets = [0, 64], sizes = [8, 32], strides = [1, 1]} : vector<8x128xf32> to vector<8x32xf32>
    %41 = vector.extract_strided_slice %36 {offsets = [0, 96], sizes = [8, 32], strides = [1, 1]} : vector<8x128xf32> to vector<8x32xf32>
    %42 = arith.mulf %39, %10 : vector<8x32xf32>
    %43 = arith.mulf %38, %40 : vector<8x32xf32>
    %44 = arith.addf %42, %43 : vector<8x32xf32>
    %45 = math.tanh %44 : vector<8x32xf32>
    %46 = arith.mulf %41, %45 : vector<8x32xf32>
    %47 = vector.extract_strided_slice %9 {offsets = [8, 0], sizes = [8, 128], strides = [1, 1]} : vector<64x128xf32> to vector<8x128xf32>
    %48 = vector.extract_strided_slice %29 {offsets = [0, 0], sizes = [8, 128], strides = [1, 1]} : vector<8x256xf32> to vector<8x128xf32>
    %49 = arith.addf %47, %48 : vector<8x128xf32>
    %50 = arith.negf %49 : vector<8x128xf32>
    %51 = math.exp %50 : vector<8x128xf32>
    %cst_13 = arith.constant 1.000000e+00 : f32
    %52 = vector.broadcast %cst_13 : f32 to vector<8x128xf32>
    %53 = arith.addf %52, %51 : vector<8x128xf32>
    %54 = arith.divf %52, %53 : vector<8x128xf32>
    %55 = math.tanh %49 : vector<8x128xf32>
    %56 = vector.extract_strided_slice %54 {offsets = [0, 0], sizes = [8, 32], strides = [1, 1]} : vector<8x128xf32> to vector<8x32xf32>
    %57 = vector.extract_strided_slice %54 {offsets = [0, 32], sizes = [8, 32], strides = [1, 1]} : vector<8x128xf32> to vector<8x32xf32>
    %58 = vector.extract_strided_slice %55 {offsets = [0, 64], sizes = [8, 32], strides = [1, 1]} : vector<8x128xf32> to vector<8x32xf32>
    %59 = vector.extract_strided_slice %54 {offsets = [0, 96], sizes = [8, 32], strides = [1, 1]} : vector<8x128xf32> to vector<8x32xf32>
    %60 = arith.mulf %57, %24 : vector<8x32xf32>
    %61 = arith.mulf %56, %58 : vector<8x32xf32>
    %62 = arith.addf %60, %61 : vector<8x32xf32>
    %63 = math.tanh %62 : vector<8x32xf32>
    %64 = arith.mulf %59, %63 : vector<8x32xf32>
    %65 = tpu.concatenate %64, %46 in 1 : vector<8x32xf32>, vector<8x32xf32> -> vector<8x64xf32>
    %66 = arith.truncf %65 : vector<8x64xf32> to vector<8x64xbf16>
    %cst_14 = arith.constant dense<0.000000e+00> : vector<8x256xf32>
    %67 = tpu.matmul %66, %0, %cst_14 {dimension_numbers = #tpu.dot_dimension_numbers<[1], [0], [0], [1], [0, 0, 1, 1], [], []>} : vector<8x64xbf16>, vector<64x256xbf16>, vector<8x256xf32> -> vector<8x256xf32>
    %68 = vector.extract_strided_slice %67 {offsets = [0, 128], sizes = [8, 128], strides = [1, 1]} : vector<8x256xf32> to vector<8x128xf32>
    %69 = arith.addf %68, %3 : vector<8x128xf32>
    %70 = arith.negf %69 : vector<8x128xf32>
    %71 = math.exp %70 : vector<8x128xf32>
    %cst_15 = arith.constant 1.000000e+00 : f32
    %72 = vector.broadcast %cst_15 : f32 to vector<8x128xf32>
    %73 = arith.addf %72, %71 : vector<8x128xf32>
    %74 = arith.divf %72, %73 : vector<8x128xf32>
    %75 = math.tanh %69 : vector<8x128xf32>
    %76 = vector.extract_strided_slice %74 {offsets = [0, 0], sizes = [8, 32], strides = [1, 1]} : vector<8x128xf32> to vector<8x32xf32>
    %77 = vector.extract_strided_slice %74 {offsets = [0, 32], sizes = [8, 32], strides = [1, 1]} : vector<8x128xf32> to vector<8x32xf32>
    %78 = vector.extract_strided_slice %75 {offsets = [0, 64], sizes = [8, 32], strides = [1, 1]} : vector<8x128xf32> to vector<8x32xf32>
    %79 = vector.extract_strided_slice %74 {offsets = [0, 96], sizes = [8, 32], strides = [1, 1]} : vector<8x128xf32> to vector<8x32xf32>
    %80 = arith.mulf %77, %44 : vector<8x32xf32>
    %81 = arith.mulf %76, %78 : vector<8x32xf32>
    %82 = arith.addf %80, %81 : vector<8x32xf32>
    %83 = math.tanh %82 : vector<8x32xf32>
    %84 = arith.mulf %79, %83 : vector<8x32xf32>
    %85 = vector.extract_strided_slice %9 {offsets = [16, 0], sizes = [8, 128], strides = [1, 1]} : vector<64x128xf32> to vector<8x128xf32>
    %86 = vector.extract_strided_slice %67 {offsets = [0, 0], sizes = [8, 128], strides = [1, 1]} : vector<8x256xf32> to vector<8x128xf32>
    %87 = arith.addf %85, %86 : vector<8x128xf32>
    %88 = arith.negf %87 : vector<8x128xf32>
    %89 = math.exp %88 : vector<8x128xf32>
    %cst_16 = arith.constant 1.000000e+00 : f32
    %90 = vector.broadcast %cst_16 : f32 to vector<8x128xf32>
    %91 = arith.addf %90, %89 : vector<8x128xf32>
    %92 = arith.divf %90, %91 : vector<8x128xf32>
    %93 = math.tanh %87 : vector<8x128xf32>
    %94 = vector.extract_strided_slice %92 {offsets = [0, 0], sizes = [8, 32], strides = [1, 1]} : vector<8x128xf32> to vector<8x32xf32>
    %95 = vector.extract_strided_slice %92 {offsets = [0, 32], sizes = [8, 32], strides = [1, 1]} : vector<8x128xf32> to vector<8x32xf32>
    %96 = vector.extract_strided_slice %93 {offsets = [0, 64], sizes = [8, 32], strides = [1, 1]} : vector<8x128xf32> to vector<8x32xf32>
    %97 = vector.extract_strided_slice %92 {offsets = [0, 96], sizes = [8, 32], strides = [1, 1]} : vector<8x128xf32> to vector<8x32xf32>
    %98 = arith.mulf %95, %62 : vector<8x32xf32>
    %99 = arith.mulf %94, %96 : vector<8x32xf32>
    %100 = arith.addf %98, %99 : vector<8x32xf32>
    %101 = math.tanh %100 : vector<8x32xf32>
    %102 = arith.mulf %97, %101 : vector<8x32xf32>
    %103 = tpu.concatenate %102, %84 in 1 : vector<8x32xf32>, vector<8x32xf32> -> vector<8x64xf32>
    %104 = arith.truncf %103 : vector<8x64xf32> to vector<8x64xbf16>
    %cst_17 = arith.constant dense<0.000000e+00> : vector<8x256xf32>
    %105 = tpu.matmul %104, %0, %cst_17 {dimension_numbers = #tpu.dot_dimension_numbers<[1], [0], [0], [1], [0, 0, 1, 1], [], []>} : vector<8x64xbf16>, vector<64x256xbf16>, vector<8x256xf32> -> vector<8x256xf32>
    %106 = vector.extract_strided_slice %105 {offsets = [0, 128], sizes = [8, 128], strides = [1, 1]} : vector<8x256xf32> to vector<8x128xf32>
    %107 = arith.addf %106, %3 : vector<8x128xf32>
    %108 = arith.negf %107 : vector<8x128xf32>
    %109 = math.exp %108 : vector<8x128xf32>
    %cst_18 = arith.constant 1.000000e+00 : f32
    %110 = vector.broadcast %cst_18 : f32 to vector<8x128xf32>
    %111 = arith.addf %110, %109 : vector<8x128xf32>
    %112 = arith.divf %110, %111 : vector<8x128xf32>
    %113 = math.tanh %107 : vector<8x128xf32>
    %114 = vector.extract_strided_slice %112 {offsets = [0, 0], sizes = [8, 32], strides = [1, 1]} : vector<8x128xf32> to vector<8x32xf32>
    %115 = vector.extract_strided_slice %112 {offsets = [0, 32], sizes = [8, 32], strides = [1, 1]} : vector<8x128xf32> to vector<8x32xf32>
    %116 = vector.extract_strided_slice %113 {offsets = [0, 64], sizes = [8, 32], strides = [1, 1]} : vector<8x128xf32> to vector<8x32xf32>
    %117 = vector.extract_strided_slice %112 {offsets = [0, 96], sizes = [8, 32], strides = [1, 1]} : vector<8x128xf32> to vector<8x32xf32>
    %118 = arith.mulf %115, %82 : vector<8x32xf32>
    %119 = arith.mulf %114, %116 : vector<8x32xf32>
    %120 = arith.addf %118, %119 : vector<8x32xf32>
    %121 = math.tanh %120 : vector<8x32xf32>
    %122 = arith.mulf %117, %121 : vector<8x32xf32>
    %123 = vector.extract_strided_slice %9 {offsets = [24, 0], sizes = [8, 128], strides = [1, 1]} : vector<64x128xf32> to vector<8x128xf32>
    %124 = vector.extract_strided_slice %105 {offsets = [0, 0], sizes = [8, 128], strides = [1, 1]} : vector<8x256xf32> to vector<8x128xf32>
    %125 = arith.addf %123, %124 : vector<8x128xf32>
    %126 = arith.negf %125 : vector<8x128xf32>
    %127 = math.exp %126 : vector<8x128xf32>
    %cst_19 = arith.constant 1.000000e+00 : f32
    %128 = vector.broadcast %cst_19 : f32 to vector<8x128xf32>
    %129 = arith.addf %128, %127 : vector<8x128xf32>
    %130 = arith.divf %128, %129 : vector<8x128xf32>
    %131 = math.tanh %125 : vector<8x128xf32>
    %132 = vector.extract_strided_slice %130 {offsets = [0, 0], sizes = [8, 32], strides = [1, 1]} : vector<8x128xf32> to vector<8x32xf32>
    %133 = vector.extract_strided_slice %130 {offsets = [0, 32], sizes = [8, 32], strides = [1, 1]} : vector<8x128xf32> to vector<8x32xf32>
    %134 = vector.extract_strided_slice %131 {offsets = [0, 64], sizes = [8, 32], strides = [1, 1]} : vector<8x128xf32> to vector<8x32xf32>
    %135 = vector.extract_strided_slice %130 {offsets = [0, 96], sizes = [8, 32], strides = [1, 1]} : vector<8x128xf32> to vector<8x32xf32>
    %136 = arith.mulf %133, %100 : vector<8x32xf32>
    %137 = arith.mulf %132, %134 : vector<8x32xf32>
    %138 = arith.addf %136, %137 : vector<8x32xf32>
    %139 = math.tanh %138 : vector<8x32xf32>
    %140 = arith.mulf %135, %139 : vector<8x32xf32>
    %141 = tpu.concatenate %140, %122 in 1 : vector<8x32xf32>, vector<8x32xf32> -> vector<8x64xf32>
    %142 = arith.truncf %141 : vector<8x64xf32> to vector<8x64xbf16>
    %cst_20 = arith.constant dense<0.000000e+00> : vector<8x256xf32>
    %143 = tpu.matmul %142, %0, %cst_20 {dimension_numbers = #tpu.dot_dimension_numbers<[1], [0], [0], [1], [0, 0, 1, 1], [], []>} : vector<8x64xbf16>, vector<64x256xbf16>, vector<8x256xf32> -> vector<8x256xf32>
    %144 = vector.extract_strided_slice %143 {offsets = [0, 128], sizes = [8, 128], strides = [1, 1]} : vector<8x256xf32> to vector<8x128xf32>
    %145 = arith.addf %144, %3 : vector<8x128xf32>
    %146 = arith.negf %145 : vector<8x128xf32>
    %147 = math.exp %146 : vector<8x128xf32>
    %cst_21 = arith.constant 1.000000e+00 : f32
    %148 = vector.broadcast %cst_21 : f32 to vector<8x128xf32>
    %149 = arith.addf %148, %147 : vector<8x128xf32>
    %150 = arith.divf %148, %149 : vector<8x128xf32>
    %151 = math.tanh %145 : vector<8x128xf32>
    %152 = vector.extract_strided_slice %150 {offsets = [0, 0], sizes = [8, 32], strides = [1, 1]} : vector<8x128xf32> to vector<8x32xf32>
    %153 = vector.extract_strided_slice %150 {offsets = [0, 32], sizes = [8, 32], strides = [1, 1]} : vector<8x128xf32> to vector<8x32xf32>
    %154 = vector.extract_strided_slice %151 {offsets = [0, 64], sizes = [8, 32], strides = [1, 1]} : vector<8x128xf32> to vector<8x32xf32>
    %155 = vector.extract_strided_slice %150 {offsets = [0, 96], sizes = [8, 32], strides = [1, 1]} : vector<8x128xf32> to vector<8x32xf32>
    %156 = arith.mulf %153, %120 : vector<8x32xf32>
    %157 = arith.mulf %152, %154 : vector<8x32xf32>
    %158 = arith.addf %156, %157 : vector<8x32xf32>
    %159 = math.tanh %158 : vector<8x32xf32>
    %160 = arith.mulf %155, %159 : vector<8x32xf32>
    %161 = vector.extract_strided_slice %9 {offsets = [32, 0], sizes = [8, 128], strides = [1, 1]} : vector<64x128xf32> to vector<8x128xf32>
    %162 = vector.extract_strided_slice %143 {offsets = [0, 0], sizes = [8, 128], strides = [1, 1]} : vector<8x256xf32> to vector<8x128xf32>
    %163 = arith.addf %161, %162 : vector<8x128xf32>
    %164 = arith.negf %163 : vector<8x128xf32>
    %165 = math.exp %164 : vector<8x128xf32>
    %cst_22 = arith.constant 1.000000e+00 : f32
    %166 = vector.broadcast %cst_22 : f32 to vector<8x128xf32>
    %167 = arith.addf %166, %165 : vector<8x128xf32>
    %168 = arith.divf %166, %167 : vector<8x128xf32>
    %169 = math.tanh %163 : vector<8x128xf32>
    %170 = vector.extract_strided_slice %168 {offsets = [0, 0], sizes = [8, 32], strides = [1, 1]} : vector<8x128xf32> to vector<8x32xf32>
    %171 = vector.extract_strided_slice %168 {offsets = [0, 32], sizes = [8, 32], strides = [1, 1]} : vector<8x128xf32> to vector<8x32xf32>
    %172 = vector.extract_strided_slice %169 {offsets = [0, 64], sizes = [8, 32], strides = [1, 1]} : vector<8x128xf32> to vector<8x32xf32>
    %173 = vector.extract_strided_slice %168 {offsets = [0, 96], sizes = [8, 32], strides = [1, 1]} : vector<8x128xf32> to vector<8x32xf32>
    %174 = arith.mulf %171, %138 : vector<8x32xf32>
    %175 = arith.mulf %170, %172 : vector<8x32xf32>
    %176 = arith.addf %174, %175 : vector<8x32xf32>
    %177 = math.tanh %176 : vector<8x32xf32>
    %178 = arith.mulf %173, %177 : vector<8x32xf32>
    %179 = tpu.concatenate %178, %160 in 1 : vector<8x32xf32>, vector<8x32xf32> -> vector<8x64xf32>
    %180 = arith.truncf %179 : vector<8x64xf32> to vector<8x64xbf16>
    %cst_23 = arith.constant dense<0.000000e+00> : vector<8x256xf32>
    %181 = tpu.matmul %180, %0, %cst_23 {dimension_numbers = #tpu.dot_dimension_numbers<[1], [0], [0], [1], [0, 0, 1, 1], [], []>} : vector<8x64xbf16>, vector<64x256xbf16>, vector<8x256xf32> -> vector<8x256xf32>
    %182 = vector.extract_strided_slice %181 {offsets = [0, 128], sizes = [8, 128], strides = [1, 1]} : vector<8x256xf32> to vector<8x128xf32>
    %183 = arith.addf %182, %3 : vector<8x128xf32>
    %184 = arith.negf %183 : vector<8x128xf32>
    %185 = math.exp %184 : vector<8x128xf32>
    %cst_24 = arith.constant 1.000000e+00 : f32
    %186 = vector.broadcast %cst_24 : f32 to vector<8x128xf32>
    %187 = arith.addf %186, %185 : vector<8x128xf32>
    %188 = arith.divf %186, %187 : vector<8x128xf32>
    %189 = math.tanh %183 : vector<8x128xf32>
    %190 = vector.extract_strided_slice %188 {offsets = [0, 0], sizes = [8, 32], strides = [1, 1]} : vector<8x128xf32> to vector<8x32xf32>
    %191 = vector.extract_strided_slice %188 {offsets = [0, 32], sizes = [8, 32], strides = [1, 1]} : vector<8x128xf32> to vector<8x32xf32>
    %192 = vector.extract_strided_slice %189 {offsets = [0, 64], sizes = [8, 32], strides = [1, 1]} : vector<8x128xf32> to vector<8x32xf32>
    %193 = vector.extract_strided_slice %188 {offsets = [0, 96], sizes = [8, 32], strides = [1, 1]} : vector<8x128xf32> to vector<8x32xf32>
    %194 = arith.mulf %191, %158 : vector<8x32xf32>
    %195 = arith.mulf %190, %192 : vector<8x32xf32>
    %196 = arith.addf %194, %195 : vector<8x32xf32>
    %197 = math.tanh %196 : vector<8x32xf32>
    %198 = arith.mulf %193, %197 : vector<8x32xf32>
    %199 = vector.extract_strided_slice %9 {offsets = [40, 0], sizes = [8, 128], strides = [1, 1]} : vector<64x128xf32> to vector<8x128xf32>
    %200 = vector.extract_strided_slice %181 {offsets = [0, 0], sizes = [8, 128], strides = [1, 1]} : vector<8x256xf32> to vector<8x128xf32>
    %201 = arith.addf %199, %200 : vector<8x128xf32>
    %202 = arith.negf %201 : vector<8x128xf32>
    %203 = math.exp %202 : vector<8x128xf32>
    %cst_25 = arith.constant 1.000000e+00 : f32
    %204 = vector.broadcast %cst_25 : f32 to vector<8x128xf32>
    %205 = arith.addf %204, %203 : vector<8x128xf32>
    %206 = arith.divf %204, %205 : vector<8x128xf32>
    %207 = math.tanh %201 : vector<8x128xf32>
    %208 = vector.extract_strided_slice %206 {offsets = [0, 0], sizes = [8, 32], strides = [1, 1]} : vector<8x128xf32> to vector<8x32xf32>
    %209 = vector.extract_strided_slice %206 {offsets = [0, 32], sizes = [8, 32], strides = [1, 1]} : vector<8x128xf32> to vector<8x32xf32>
    %210 = vector.extract_strided_slice %207 {offsets = [0, 64], sizes = [8, 32], strides = [1, 1]} : vector<8x128xf32> to vector<8x32xf32>
    %211 = vector.extract_strided_slice %206 {offsets = [0, 96], sizes = [8, 32], strides = [1, 1]} : vector<8x128xf32> to vector<8x32xf32>
    %212 = arith.mulf %209, %176 : vector<8x32xf32>
    %213 = arith.mulf %208, %210 : vector<8x32xf32>
    %214 = arith.addf %212, %213 : vector<8x32xf32>
    %215 = math.tanh %214 : vector<8x32xf32>
    %216 = arith.mulf %211, %215 : vector<8x32xf32>
    %217 = tpu.concatenate %216, %198 in 1 : vector<8x32xf32>, vector<8x32xf32> -> vector<8x64xf32>
    %218 = arith.truncf %217 : vector<8x64xf32> to vector<8x64xbf16>
    %cst_26 = arith.constant dense<0.000000e+00> : vector<8x256xf32>
    %219 = tpu.matmul %218, %0, %cst_26 {dimension_numbers = #tpu.dot_dimension_numbers<[1], [0], [0], [1], [0, 0, 1, 1], [], []>} : vector<8x64xbf16>, vector<64x256xbf16>, vector<8x256xf32> -> vector<8x256xf32>
    %220 = vector.extract_strided_slice %219 {offsets = [0, 128], sizes = [8, 128], strides = [1, 1]} : vector<8x256xf32> to vector<8x128xf32>
    %221 = arith.addf %220, %3 : vector<8x128xf32>
    %222 = arith.negf %221 : vector<8x128xf32>
    %223 = math.exp %222 : vector<8x128xf32>
    %cst_27 = arith.constant 1.000000e+00 : f32
    %224 = vector.broadcast %cst_27 : f32 to vector<8x128xf32>
    %225 = arith.addf %224, %223 : vector<8x128xf32>
    %226 = arith.divf %224, %225 : vector<8x128xf32>
    %227 = math.tanh %221 : vector<8x128xf32>
    %228 = vector.extract_strided_slice %226 {offsets = [0, 0], sizes = [8, 32], strides = [1, 1]} : vector<8x128xf32> to vector<8x32xf32>
    %229 = vector.extract_strided_slice %226 {offsets = [0, 32], sizes = [8, 32], strides = [1, 1]} : vector<8x128xf32> to vector<8x32xf32>
    %230 = vector.extract_strided_slice %227 {offsets = [0, 64], sizes = [8, 32], strides = [1, 1]} : vector<8x128xf32> to vector<8x32xf32>
    %231 = vector.extract_strided_slice %226 {offsets = [0, 96], sizes = [8, 32], strides = [1, 1]} : vector<8x128xf32> to vector<8x32xf32>
    %232 = arith.mulf %229, %196 : vector<8x32xf32>
    %233 = arith.mulf %228, %230 : vector<8x32xf32>
    %234 = arith.addf %232, %233 : vector<8x32xf32>
    %235 = math.tanh %234 : vector<8x32xf32>
    %236 = arith.mulf %231, %235 : vector<8x32xf32>
    %237 = vector.extract_strided_slice %9 {offsets = [48, 0], sizes = [8, 128], strides = [1, 1]} : vector<64x128xf32> to vector<8x128xf32>
    %238 = vector.extract_strided_slice %219 {offsets = [0, 0], sizes = [8, 128], strides = [1, 1]} : vector<8x256xf32> to vector<8x128xf32>
    %239 = arith.addf %237, %238 : vector<8x128xf32>
    %240 = arith.negf %239 : vector<8x128xf32>
    %241 = math.exp %240 : vector<8x128xf32>
    %cst_28 = arith.constant 1.000000e+00 : f32
    %242 = vector.broadcast %cst_28 : f32 to vector<8x128xf32>
    %243 = arith.addf %242, %241 : vector<8x128xf32>
    %244 = arith.divf %242, %243 : vector<8x128xf32>
    %245 = math.tanh %239 : vector<8x128xf32>
    %246 = vector.extract_strided_slice %244 {offsets = [0, 0], sizes = [8, 32], strides = [1, 1]} : vector<8x128xf32> to vector<8x32xf32>
    %247 = vector.extract_strided_slice %244 {offsets = [0, 32], sizes = [8, 32], strides = [1, 1]} : vector<8x128xf32> to vector<8x32xf32>
    %248 = vector.extract_strided_slice %245 {offsets = [0, 64], sizes = [8, 32], strides = [1, 1]} : vector<8x128xf32> to vector<8x32xf32>
    %249 = vector.extract_strided_slice %244 {offsets = [0, 96], sizes = [8, 32], strides = [1, 1]} : vector<8x128xf32> to vector<8x32xf32>
    %250 = arith.mulf %247, %214 : vector<8x32xf32>
    %251 = arith.mulf %246, %248 : vector<8x32xf32>
    %252 = arith.addf %250, %251 : vector<8x32xf32>
    %253 = math.tanh %252 : vector<8x32xf32>
    %254 = arith.mulf %249, %253 : vector<8x32xf32>
    %255 = tpu.concatenate %254, %236 in 1 : vector<8x32xf32>, vector<8x32xf32> -> vector<8x64xf32>
    %256 = arith.truncf %255 : vector<8x64xf32> to vector<8x64xbf16>
    %cst_29 = arith.constant dense<0.000000e+00> : vector<8x256xf32>
    %257 = tpu.matmul %256, %0, %cst_29 {dimension_numbers = #tpu.dot_dimension_numbers<[1], [0], [0], [1], [0, 0, 1, 1], [], []>} : vector<8x64xbf16>, vector<64x256xbf16>, vector<8x256xf32> -> vector<8x256xf32>
    %258 = vector.extract_strided_slice %257 {offsets = [0, 128], sizes = [8, 128], strides = [1, 1]} : vector<8x256xf32> to vector<8x128xf32>
    %259 = arith.addf %258, %3 : vector<8x128xf32>
    %260 = arith.negf %259 : vector<8x128xf32>
    %261 = math.exp %260 : vector<8x128xf32>
    %cst_30 = arith.constant 1.000000e+00 : f32
    %262 = vector.broadcast %cst_30 : f32 to vector<8x128xf32>
    %263 = arith.addf %262, %261 : vector<8x128xf32>
    %264 = arith.divf %262, %263 : vector<8x128xf32>
    %265 = math.tanh %259 : vector<8x128xf32>
    %266 = vector.extract_strided_slice %264 {offsets = [0, 0], sizes = [8, 32], strides = [1, 1]} : vector<8x128xf32> to vector<8x32xf32>
    %267 = vector.extract_strided_slice %264 {offsets = [0, 32], sizes = [8, 32], strides = [1, 1]} : vector<8x128xf32> to vector<8x32xf32>
    %268 = vector.extract_strided_slice %265 {offsets = [0, 64], sizes = [8, 32], strides = [1, 1]} : vector<8x128xf32> to vector<8x32xf32>
    %269 = vector.extract_strided_slice %264 {offsets = [0, 96], sizes = [8, 32], strides = [1, 1]} : vector<8x128xf32> to vector<8x32xf32>
    %270 = arith.mulf %267, %234 : vector<8x32xf32>
    %271 = arith.mulf %266, %268 : vector<8x32xf32>
    %272 = arith.addf %270, %271 : vector<8x32xf32>
    %273 = math.tanh %272 : vector<8x32xf32>
    %274 = arith.mulf %269, %273 : vector<8x32xf32>
    %275 = vector.extract_strided_slice %9 {offsets = [56, 0], sizes = [8, 128], strides = [1, 1]} : vector<64x128xf32> to vector<8x128xf32>
    %276 = vector.extract_strided_slice %257 {offsets = [0, 0], sizes = [8, 128], strides = [1, 1]} : vector<8x256xf32> to vector<8x128xf32>
    %277 = arith.addf %275, %276 : vector<8x128xf32>
    %278 = arith.negf %277 : vector<8x128xf32>
    %279 = math.exp %278 : vector<8x128xf32>
    %cst_31 = arith.constant 1.000000e+00 : f32
    %280 = vector.broadcast %cst_31 : f32 to vector<8x128xf32>
    %281 = arith.addf %280, %279 : vector<8x128xf32>
    %282 = arith.divf %280, %281 : vector<8x128xf32>
    %283 = math.tanh %277 : vector<8x128xf32>
    %284 = vector.extract_strided_slice %282 {offsets = [0, 0], sizes = [8, 32], strides = [1, 1]} : vector<8x128xf32> to vector<8x32xf32>
    %285 = vector.extract_strided_slice %282 {offsets = [0, 32], sizes = [8, 32], strides = [1, 1]} : vector<8x128xf32> to vector<8x32xf32>
    %286 = vector.extract_strided_slice %283 {offsets = [0, 64], sizes = [8, 32], strides = [1, 1]} : vector<8x128xf32> to vector<8x32xf32>
    %287 = vector.extract_strided_slice %282 {offsets = [0, 96], sizes = [8, 32], strides = [1, 1]} : vector<8x128xf32> to vector<8x32xf32>
    %288 = arith.mulf %285, %252 : vector<8x32xf32>
    %289 = arith.mulf %284, %286 : vector<8x32xf32>
    %290 = arith.addf %288, %289 : vector<8x32xf32>
    %291 = math.tanh %290 : vector<8x32xf32>
    %292 = arith.mulf %287, %291 : vector<8x32xf32>
    %293 = tpu.concatenate %292, %274 in 1 : vector<8x32xf32>, vector<8x32xf32> -> vector<8x64xf32>
    %294 = arith.truncf %293 : vector<8x64xf32> to vector<8x64xbf16>
    %cst_32 = arith.constant dense<0.000000e+00> : vector<8x256xf32>
    %295 = tpu.matmul %294, %0, %cst_32 {dimension_numbers = #tpu.dot_dimension_numbers<[1], [0], [0], [1], [0, 0, 1, 1], [], []>} : vector<8x64xbf16>, vector<64x256xbf16>, vector<8x256xf32> -> vector<8x256xf32>
    %296 = vector.extract_strided_slice %295 {offsets = [0, 128], sizes = [8, 128], strides = [1, 1]} : vector<8x256xf32> to vector<8x128xf32>
    %297 = arith.addf %296, %3 : vector<8x128xf32>
    %298 = arith.negf %297 : vector<8x128xf32>
    %299 = math.exp %298 : vector<8x128xf32>
    %cst_33 = arith.constant 1.000000e+00 : f32
    %300 = vector.broadcast %cst_33 : f32 to vector<8x128xf32>
    %301 = arith.addf %300, %299 : vector<8x128xf32>
    %302 = arith.divf %300, %301 : vector<8x128xf32>
    %303 = math.tanh %297 : vector<8x128xf32>
    %304 = vector.extract_strided_slice %302 {offsets = [0, 0], sizes = [8, 32], strides = [1, 1]} : vector<8x128xf32> to vector<8x32xf32>
    %305 = vector.extract_strided_slice %302 {offsets = [0, 32], sizes = [8, 32], strides = [1, 1]} : vector<8x128xf32> to vector<8x32xf32>
    %306 = vector.extract_strided_slice %303 {offsets = [0, 64], sizes = [8, 32], strides = [1, 1]} : vector<8x128xf32> to vector<8x32xf32>
    %307 = vector.extract_strided_slice %302 {offsets = [0, 96], sizes = [8, 32], strides = [1, 1]} : vector<8x128xf32> to vector<8x32xf32>
    %308 = arith.mulf %305, %272 : vector<8x32xf32>
    %309 = arith.mulf %304, %306 : vector<8x32xf32>
    %310 = arith.addf %308, %309 : vector<8x32xf32>
    %311 = math.tanh %310 : vector<8x32xf32>
    %312 = arith.mulf %307, %311 : vector<8x32xf32>
    %c0_34 = arith.constant 0 : index
    %c0_35 = arith.constant 0 : index
    %313 = vector.load %arg5[%c0_34, %c0_35] : memref<1x32xf32, #tpu.memory_space<vmem>>, vector<1x32xf32>
    %314 = vector.broadcast %313 : vector<1x32xf32> to vector<8x32xf32>
    %315 = arith.mulf %312, %314 : vector<8x32xf32>
    %cst_36 = arith.constant dense<0.000000e+00> : vector<8xf32>
    %316 = vector.multi_reduction <add>, %315, %cst_36 [1] : vector<8x32xf32> to vector<8xf32>
    %317 = vector.shape_cast %316 : vector<8xf32> to vector<8x1xf32>
    %c0_37 = arith.constant 0 : index
    %c0_38 = arith.constant 0 : index
    %318 = vector.load %arg6[%c0_37, %c0_38] : memref<1x1xf32, #tpu.memory_space<vmem>>, vector<1x1xf32>
    %319 = vector.broadcast %318 : vector<1x1xf32> to vector<8x1xf32>
    %320 = arith.addf %317, %319 : vector<8x1xf32>
    %c0_39 = arith.constant 0 : index
    %c0_40 = arith.constant 0 : index
    %321 = vector.load %arg7[%c0_39, %c0_40] : memref<8x1xf32, #tpu.memory_space<vmem>>, vector<8x1xf32>
    tpu.vector_store %arg7[%c0_39, %c0_40], %320 {strides = array<i32>} : memref<8x1xf32, #tpu.memory_space<vmem>>, vector<8x1xf32>,
    return
  }
}

</mosaic_0001>

<llo_original>
// kernel: demand_forecast.1
$region0: #{demand_forecast.1}
  #allocation0 [shape = 'u32[]', space=smem, size = 0x4, offset = 0x4, fixed_abs, tag = 'smem constant byte address 0x4 - core index']
  #allocation1 [shape = 'u32[144,128]{1,0:T(1,128)}', space=vmem, size = 0x12000, scoped, tag = 'internal scratch']
  #allocation2 [shape = 'f32[1,1]{1,0:T(1,128)S(1)}', space=vmem, size = 0x200, scoped, tag = 'scoped memory for demand_forecast.1']
  %s0 = inlined_call_operand.vmem [shape: bf16[64,4], index: 0, kind: input, shape index: {}]
  %s1 = inlined_call_operand.vmem [shape: bf16[4,128], index: 1, kind: input, shape index: {}]
  %s2 = inlined_call_operand.vmem [shape: f32[1,128], index: 2, kind: input, shape index: {}]
  %s3 = inlined_call_operand.vmem [shape: bf16[64,256], index: 3, kind: input, shape index: {}]
  %s4 = inlined_call_operand.vmem [shape: f32[1,128], index: 4, kind: input, shape index: {}]
  %s5 = inlined_call_operand.vmem [shape: f32[1,32], index: 5, kind: input, shape index: {}]
  %s6 = inlined_call_operand.<no memory space> [shape: f32[1,1], index: 6, kind: input, shape index: {}]
  %s7 = inlined_call_operand.vmem [shape: f32[8,1], index: 7, kind: output, shape index: {}]
  %s8 = sld [smem:[#allocation0]]
  $region38: #{demand_forecast.1} parent=0
    _
  %s10 = ssub.s32 1, %s8
  %s11 = scalar_select 0, %s10, %s8
  %v12 = vstv %s6
  %13 = vst [vmem:[#allocation2] sm:$0x1] %v12
  // Predicated region
  $region2: #{demand_forecast.1} parent=0 // pred_check
    _
  $region3: #{demand_forecast.1} parent=0 // pred_check_branch
    %15 = sbr.rel (0) target = $region5
  $region4: #{demand_forecast.1} parent=0 // pred_region
    _
  $region5: #{demand_forecast.1} parent=0 // pred_fallthru
    _
  // Predicated region
  $region6: #{demand_forecast.1} parent=0 // pred_check
    _
  $region7: #{demand_forecast.1} parent=0 // pred_check_branch
    %17 = sbr.rel (0) target = $region9
  $region8: #{demand_forecast.1} parent=0 // pred_region
    _
  $region9: #{demand_forecast.1} parent=0 // pred_fallthru
    _
  // Predicated region
  $region10: #{demand_forecast.1} parent=0 // pred_check
    _
  $region11: #{demand_forecast.1} parent=0 // pred_check_branch
    %19 = sbr.rel (0) target = $region13
  $region12: #{demand_forecast.1} parent=0 // pred_region
    _
  $region13: #{demand_forecast.1} parent=0 // pred_fallthru
    _
  // Predicated region
  $region14: #{demand_forecast.1} parent=0 // pred_check
    _
  $region15: #{demand_forecast.1} parent=0 // pred_check_branch
    %21 = sbr.rel (0) target = $region17
  $region16: #{demand_forecast.1} parent=0 // pred_region
    _
  $region17: #{demand_forecast.1} parent=0 // pred_fallthru
    _
  // Predicated region
  $region18: #{demand_forecast.1} parent=0 // pred_check
    _
  $region19: #{demand_forecast.1} parent=0 // pred_check_branch
    %23 = sbr.rel (0) target = $region21
  $region20: #{demand_forecast.1} parent=0 // pred_region
    _
  $region21: #{demand_forecast.1} parent=0 // pred_fallthru
    _
  // Predicated region
  $region22: #{demand_forecast.1} parent=0 // pred_check
    _
  $region23: #{demand_forecast.1} parent=0 // pred_check_branch
    %25 = sbr.rel (0) target = $region25
  $region24: #{demand_forecast.1} parent=0 // pred_region
    _
  $region25: #{demand_forecast.1} parent=0 // pred_fallthru
    _
  // Predicated region
  $region26: #{demand_forecast.1} parent=0 // pred_check
    _
  $region27: #{demand_forecast.1} parent=0 // pred_check_branch
    %27 = sbr.rel (0) target = $region29
  $region28: #{demand_forecast.1} parent=0 // pred_region
    _
  $region29: #{demand_forecast.1} parent=0 // pred_fallthru
    _
  %v29 = vld [vmem:[%s3] sm:$0xff]
  %v30 = vld [vmem:[%s3 + $0x8] sm:$0xff]
  %v31 = vld [vmem:[%s3 + $0x10] sm:$0xff]
  %v32 = vld [vmem:[%s3 + $0x18] sm:$0xff]
  %v33 = vld [vmem:[%s3 + $0x20] sm:$0xff]
  %v34 = vld [vmem:[%s3 + $0x28] sm:$0xff]
  %v35 = vld [vmem:[%s3 + $0x30] sm:$0xff]
  %v36 = vld [vmem:[%s3 + $0x38] sm:$0xff]
  %v37 = vld [vmem:[%s4] sm:$0x1]
  %v39 = vlaneseq
  %v40 = vshrl.u32 %v39, 7
  %v41 = vsub.s32 0, %v40
  %v42 = vrot.slane %v37, %v41
  %v44 = vld [vmem:[%s0] sm:$0xf]
  %v45 = vld [vmem:[%s0 + $0x4] sm:$0xf]
  %v46 = vld [vmem:[%s0 + $0x8] sm:$0xf]
  %v47 = vld [vmem:[%s0 + $0xc] sm:$0xf]
  %v48 = vld [vmem:[%s0 + $0x10] sm:$0xf]
  %v49 = vld [vmem:[%s0 + $0x14] sm:$0xf]
  %v50 = vld [vmem:[%s0 + $0x18] sm:$0xf]
  %v51 = vld [vmem:[%s0 + $0x1c] sm:$0xf]
  %v52 = vld [vmem:[%s1] sm:$0x3]
  %v53 = vld [vmem:[%s2] sm:$0x1]
  %v55 = vlaneseq
  %v56 = vshrl.u32 %v55, 7
  %v57 = vsub.s32 0, %v56
  %v58 = vrot.slane %v53, %v57
  %v68 = vunpack.c.l.b16 %v44
  %v69 = vunpack.c.l.b16 %v45
  %v70 = vunpack.c.l.b16 %v46
  %v71 = vunpack.c.l.b16 %v47
  %v72 = vunpack.c.l.b16 %v48
  %v73 = vunpack.c.l.b16 %v49
  %v74 = vunpack.c.l.b16 %v50
  %v75 = vunpack.c.l.b16 %v51
  %v76 = vpack.c.b16 %v69, %v68
  %v77 = vpack.c.b16 %v71, %v70
  %v78 = vpack.c.b16 %v73, %v72
  %v79 = vpack.c.b16 %v75, %v74
  %vm80 = vcmask 31744
  %v82 = vsel %vm80, %v76, 0
  %v85 = vsel %vm80, %v77, 0
  %v88 = vsel %vm80, %v78, 0
  %v91 = vsel %vm80, %v79, 0
  %vm93 = vcmask 1041408
  %v95 = vsel %vm93, %v52, 0
  %97 = vmatprep.subr.bf16.mxu0 0
  %98 = vmatpush1.bf16.msra.mxu0 %v95
  %99 = vmatprep.subr.bf16.mxu0 0
  %100 = vmatpush1.bf16.msra.mxu0 0
  %101 = vmatprep.subr.bf16.mxu0 0
  %102 = vmatpush1.bf16.msra.mxu0 0
  %103 = vmatprep.subr.bf16.mxu0 0
  %104 = vmatpush1.bf16.msra.mxu0 0
  %105 = vmatprep.subr.bf16.mxu0 0
  %106 = vmatpush1.bf16.msra.mxu0 0
  %107 = vmatprep.subr.bf16.mxu0 0
  %108 = vmatpush1.bf16.msra.mxu0 0
  %109 = vmatprep.subr.bf16.mxu0 0
  %110 = vmatpush1.bf16.msra.mxu0 0
  %111 = vmatprep.subr.bf16.mxu0 0
  %112 = vmatpush1.bf16.msra.mxu0 0
  %113 = vmatprep.subr.bf16.mxu0 0
  %114 = vmatpush1.bf16.msra.mxu0 0
  %115 = vmatprep.subr.bf16.mxu0 0
  %116 = vmatpush1.bf16.msra.mxu0 0
  %117 = vmatprep.subr.bf16.mxu0 0
  %118 = vmatpush1.bf16.msra.mxu0 0
  %119 = vmatprep.subr.bf16.mxu0 0
  %120 = vmatpush1.bf16.msra.mxu0 0
  %121 = vmatprep.subr.bf16.mxu0 0
  %122 = vmatpush1.bf16.msra.mxu0 0
  %123 = vmatprep.subr.bf16.mxu0 0
  %124 = vmatpush1.bf16.msra.mxu0 0
  %125 = vmatprep.subr.bf16.mxu0 0
  %126 = vmatpush1.bf16.msra.mxu0 0
  %127 = vmatprep.subr.bf16.mxu0 0
  %128 = vmatpush1.bf16.msra.mxu0 0
  %129 = vmatprep.mubr.bf16.mxu0 0
  %130 = vmatmul.mubr.bf16.gmra.mrb[0].mxu0 %v82
  %v131 = vpop.f32.mrb[0].mxu0
  %v132 = vadd.f32 %v58, %v131
  %v133 = vpop.f32.mrb[0].mxu0
  %v134 = vpop.f32.mrb[0].mxu0
  %v135 = vadd.f32 %v58, %v134
  %v136 = vpop.f32.mrb[0].mxu0
  %137 = vmatprep.mubr.bf16.mxu0 0
  %138 = vmatmul.mubr.bf16.gmra.mrb[0].mxu0 %v85
  %v139 = vpop.f32.mrb[0].mxu0
  %v140 = vadd.f32 %v58, %v139
  %v141 = vpop.f32.mrb[0].mxu0
  %v142 = vpop.f32.mrb[0].mxu0
  %v143 = vadd.f32 %v58, %v142
  %v144 = vpop.f32.mrb[0].mxu0
  %145 = vmatprep.mubr.bf16.mxu0 0
  %146 = vmatmul.mubr.bf16.gmra.mrb[0].mxu0 %v88
  %v147 = vpop.f32.mrb[0].mxu0
  %v148 = vadd.f32 %v58, %v147
  %v149 = vpop.f32.mrb[0].mxu0
  %v150 = vpop.f32.mrb[0].mxu0
  %v151 = vadd.f32 %v58, %v150
  %v152 = vpop.f32.mrb[0].mxu0
  %153 = vmatprep.mubr.bf16.mxu0 0
  %154 = vmatmul.mubr.bf16.gmra.mrb[0].mxu0 %v91
  %v155 = vpop.f32.mrb[0].mxu0
  %v156 = vadd.f32 %v58, %v155
  %v157 = vpop.f32.mrb[0].mxu0
  %v158 = vpop.f32.mrb[0].mxu0
  %v159 = vadd.f32 %v58, %v158
  %v160 = vpop.f32.mrb[0].mxu0
  %161 = vdwg.mxu0
  %v162 = vxor.u32 %v132, 2147483648
  %v163 = vmul.f32 %v162, 1.442695
  %v164 = vpow.pop %v163
  %v165 = vadd.f32 %v164, 1.0
  %v166 = vrcp.pop %v165
  %v167 = vmul.f32 1.0, %v166
  %v168 = vtanh.pop %v132
  %v169 = vmul.f32 %v167, 0.0
  %171 = vrot.lane.b32.xlu0 %v168, 64
  %v172 = vpop.permute.xlu0 %171
  %v174 = vmul.f32 %v167, %v172
  %176 = vrot.lane.b32.xlu0 %v174, 32
  %v177 = vpop.permute.xlu0 %176
  %v179 = vadd.f32 %v169, %v177
  %v180 = vtanh.pop %v179
  %182 = vrot.lane.b32.xlu0 %v180, 64
  %v183 = vpop.permute.xlu0 %182
  %v185 = vmul.f32 %v167, %v183
  %187 = vrot.lane.b32.xlu0 %v185, 32
  %v188 = vpop.permute.xlu0 %187
  %vm190 = vcmask 261120
  %v191 = vsel %vm190, %v188, 0.0
  %v192 = vpack.c.bf16 %v191, %v191
  %v201 = vunpack.c.l.b16 %v29
  %v202 = vunpack.c.h.b16 %v29
  %v203 = vunpack.c.l.b16 %v30
  %v204 = vunpack.c.h.b16 %v30
  %v205 = vunpack.c.l.b16 %v31
  %v206 = vunpack.c.h.b16 %v31
  %v207 = vunpack.c.l.b16 %v32
  %v208 = vunpack.c.h.b16 %v32
  %v209 = vunpack.c.l.b16 %v33
  %v210 = vunpack.c.h.b16 %v33
  %v211 = vunpack.c.l.b16 %v34
  %v212 = vunpack.c.h.b16 %v34
  %v213 = vunpack.c.l.b16 %v35
  %v214 = vunpack.c.h.b16 %v35
  %v215 = vunpack.c.l.b16 %v36
  %v216 = vunpack.c.h.b16 %v36
  %v217 = vpack.c.b16 %v203, %v201
  %v218 = vpack.c.b16 %v204, %v202
  %v219 = vpack.c.b16 %v207, %v205
  %v220 = vpack.c.b16 %v208, %v206
  %v221 = vpack.c.b16 %v211, %v209
  %v222 = vpack.c.b16 %v212, %v210
  %v223 = vpack.c.b16 %v215, %v213
  %v224 = vpack.c.b16 %v216, %v214
  %vm233 = vcmask 523264
  %v235 = vsel %vm233, %v192, 0
  %237 = vmatprep.subr.bf16.mxu0 %v218
  %238 = vmatpush1.bf16.msra.mxu0 %v217
  %239 = vmatprep.subr.bf16.mxu0 %v220
  %240 = vmatpush1.bf16.msra.mxu0 %v219
  %241 = vmatprep.subr.bf16.mxu0 %v222
  %242 = vmatpush1.bf16.msra.mxu0 %v221
  %243 = vmatprep.subr.bf16.mxu0 %v224
  %244 = vmatpush1.bf16.msra.mxu0 %v223
  %245 = vmatprep.subr.bf16.mxu0 0
  %246 = vmatpush1.bf16.msra.mxu0 0
  %247 = vmatprep.subr.bf16.mxu0 0
  %248 = vmatpush1.bf16.msra.mxu0 0
  %249 = vmatprep.subr.bf16.mxu0 0
  %250 = vmatpush1.bf16.msra.mxu0 0
  %251 = vmatprep.subr.bf16.mxu0 0
  %252 = vmatpush1.bf16.msra.mxu0 0
  %253 = vmatprep.subr.bf16.mxu0 0
  %254 = vmatpush1.bf16.msra.mxu0 0
  %255 = vmatprep.subr.bf16.mxu0 0
  %256 = vmatpush1.bf16.msra.mxu0 0
  %257 = vmatprep.subr.bf16.mxu0 0
  %258 = vmatpush1.bf16.msra.mxu0 0
  %259 = vmatprep.subr.bf16.mxu0 0
  %260 = vmatpush1.bf16.msra.mxu0 0
  %261 = vmatprep.subr.bf16.mxu0 0
  %262 = vmatpush1.bf16.msra.mxu0 0
  %263 = vmatprep.subr.bf16.mxu0 0
  %264 = vmatpush1.bf16.msra.mxu0 0
  %265 = vmatprep.subr.bf16.mxu0 0
  %266 = vmatpush1.bf16.msra.mxu0 0
  %267 = vmatprep.subr.bf16.mxu0 0
  %268 = vmatpush1.bf16.msra.mxu0 0
  %269 = vmatprep.mubr.bf16.mxu0 0
  %270 = vmatmul.mubr.bf16.gmra.mrb[0].mxu0 %v235
  %v271 = vpop.f32.mrb[0].mxu0
  %v272 = vadd.f32 0.0, %v271
  %v273 = vpop.f32.mrb[0].mxu0
  %v274 = vadd.f32 0.0, %v273
  %v275 = vpop.f32.mrb[0].mxu0
  %v276 = vpop.f32.mrb[0].mxu0
  %277 = vdwg.mxu0
  %v278 = vadd.f32 %v274, %v42
  %v279 = vxor.u32 %v278, 2147483648
  %v280 = vmul.f32 %v279, 1.442695
  %v281 = vpow.pop %v280
  %v282 = vadd.f32 %v281, 1.0
  %v283 = vrcp.pop %v282
  %v284 = vmul.f32 1.0, %v283
  %v285 = vtanh.pop %v278
  %v286 = vmul.f32 %v284, 0.0
  %288 = vrot.lane.b32.xlu0 %v285, 64
  %v289 = vpop.permute.xlu0 %288
  %v291 = vmul.f32 %v284, %v289
  %293 = vrot.lane.b32.xlu0 %v291, 32
  %v294 = vpop.permute.xlu0 %293
  %v296 = vadd.f32 %v286, %v294
  %v297 = vtanh.pop %v296
  %299 = vrot.lane.b32.xlu0 %v297, 64
  %v300 = vpop.permute.xlu0 %299
  %v302 = vmul.f32 %v284, %v300
  %v303 = vadd.f32 %v135, %v272
  %v304 = vxor.u32 %v303, 2147483648
  %v305 = vmul.f32 %v304, 1.442695
  %v306 = vpow.pop %v305
  %v307 = vadd.f32 %v306, 1.0
  %v308 = vrcp.pop %v307
  %v309 = vmul.f32 1.0, %v308
  %v310 = vtanh.pop %v303
  %v311 = vmul.f32 %v309, %v179
  %313 = vrot.lane.b32.xlu0 %v310, 64
  %v314 = vpop.permute.xlu0 %313
  %v316 = vmul.f32 %v309, %v314
  %318 = vrot.lane.b32.xlu0 %v316, 32
  %v319 = vpop.permute.xlu0 %318
  %v321 = vadd.f32 %v311, %v319
  %v322 = vtanh.pop %v321
  %324 = vrot.lane.b32.xlu0 %v322, 64
  %v325 = vpop.permute.xlu0 %324
  %v327 = vmul.f32 %v309, %v325
  %329 = vrot.lane.b32.xlu0 %v327, 32
  %v330 = vpop.permute.xlu0 %329
  %333 = vrot.lane.b32.xlu0 %v302, 64
  %v334 = vpop.permute.xlu0 %333
  %v336 = vsel %vm190, %v330, %v334
  %v337 = vpack.c.bf16 %v336, %v336
  %v339 = vsel %vm233, %v337, 0
  %341 = vmatprep.subr.bf16.mxu0 %v218
  %342 = vmatpush1.bf16.msra.mxu0 %v217
  %343 = vmatprep.subr.bf16.mxu0 %v220
  %344 = vmatpush1.bf16.msra.mxu0 %v219
  %345 = vmatprep.subr.bf16.mxu0 %v222
  %346 = vmatpush1.bf16.msra.mxu0 %v221
  %347 = vmatprep.subr.bf16.mxu0 %v224
  %348 = vmatpush1.bf16.msra.mxu0 %v223
  %349 = vmatprep.subr.bf16.mxu0 0
  %350 = vmatpush1.bf16.msra.mxu0 0
  %351 = vmatprep.subr.bf16.mxu0 0
  %352 = vmatpush1.bf16.msra.mxu0 0
  %353 = vmatprep.subr.bf16.mxu0 0
  %354 = vmatpush1.bf16.msra.mxu0 0
  %355 = vmatprep.subr.bf16.mxu0 0
  %356 = vmatpush1.bf16.msra.mxu0 0
  %357 = vmatprep.subr.bf16.mxu0 0
  %358 = vmatpush1.bf16.msra.mxu0 0
  %359 = vmatprep.subr.bf16.mxu0 0
  %360 = vmatpush1.bf16.msra.mxu0 0
  %361 = vmatprep.subr.bf16.mxu0 0
  %362 = vmatpush1.bf16.msra.mxu0 0
  %363 = vmatprep.subr.bf16.mxu0 0
  %364 = vmatpush1.bf16.msra.mxu0 0
  %365 = vmatprep.subr.bf16.mxu0 0
  %366 = vmatpush1.bf16.msra.mxu0 0
  %367 = vmatprep.subr.bf16.mxu0 0
  %368 = vmatpush1.bf16.msra.mxu0 0
  %369 = vmatprep.subr.bf16.mxu0 0
  %370 = vmatpush1.bf16.msra.mxu0 0
  %371 = vmatprep.subr.bf16.mxu0 0
  %372 = vmatpush1.bf16.msra.mxu0 0
  %373 = vmatprep.mubr.bf16.mxu0 0
  %374 = vmatmul.mubr.bf16.gmra.mrb[0].mxu0 %v339
  %v375 = vpop.f32.mrb[0].mxu0
  %v376 = vadd.f32 0.0, %v375
  %v377 = vpop.f32.mrb[0].mxu0
  %v378 = vadd.f32 0.0, %v377
  %v379 = vpop.f32.mrb[0].mxu0
  %v380 = vpop.f32.mrb[0].mxu0
  %381 = vdwg.mxu0
  %v382 = vadd.f32 %v378, %v42
  %v383 = vxor.u32 %v382, 2147483648
  %v384 = vmul.f32 %v383, 1.442695
  %v385 = vpow.pop %v384
  %v386 = vadd.f32 %v385, 1.0
  %v387 = vrcp.pop %v386
  %v388 = vmul.f32 1.0, %v387
  %v389 = vtanh.pop %v382
  %v390 = vmul.f32 %v388, %v296
  %392 = vrot.lane.b32.xlu0 %v389, 64
  %v393 = vpop.permute.xlu0 %392
  %v395 = vmul.f32 %v388, %v393
  %397 = vrot.lane.b32.xlu0 %v395, 32
  %v398 = vpop.permute.xlu0 %397
  %v400 = vadd.f32 %v390, %v398
  %v401 = vtanh.pop %v400
  %403 = vrot.lane.b32.xlu0 %v401, 64
  %v404 = vpop.permute.xlu0 %403
  %v406 = vmul.f32 %v388, %v404
  %v407 = vadd.f32 %v140, %v376
  %v408 = vxor.u32 %v407, 2147483648
  %v409 = vmul.f32 %v408, 1.442695
  %v410 = vpow.pop %v409
  %v411 = vadd.f32 %v410, 1.0
  %v412 = vrcp.pop %v411
  %v413 = vmul.f32 1.0, %v412
  %v414 = vtanh.pop %v407
  %v415 = vmul.f32 %v413, %v321
  %417 = vrot.lane.b32.xlu0 %v414, 64
  %v418 = vpop.permute.xlu0 %417
  %v420 = vmul.f32 %v413, %v418
  %422 = vrot.lane.b32.xlu0 %v420, 32
  %v423 = vpop.permute.xlu0 %422
  %v425 = vadd.f32 %v415, %v423
  %v426 = vtanh.pop %v425
  %428 = vrot.lane.b32.xlu0 %v426, 64
  %v429 = vpop.permute.xlu0 %428
  %v431 = vmul.f32 %v413, %v429
  %433 = vrot.lane.b32.xlu0 %v431, 32
  %v434 = vpop.permute.xlu0 %433
  %437 = vrot.lane.b32.xlu0 %v406, 64
  %v438 = vpop.permute.xlu0 %437
  %v440 = vsel %vm190, %v434, %v438
  %v441 = vpack.c.bf16 %v440, %v440
  %v443 = vsel %vm233, %v441, 0
  %445 = vmatprep.subr.bf16.mxu0 %v218
  %446 = vmatpush1.bf16.msra.mxu0 %v217
  %447 = vmatprep.subr.bf16.mxu0 %v220
  %448 = vmatpush1.bf16.msra.mxu0 %v219
  %449 = vmatprep.subr.bf16.mxu0 %v222
  %450 = vmatpush1.bf16.msra.mxu0 %v221
  %451 = vmatprep.subr.bf16.mxu0 %v224
  %452 = vmatpush1.bf16.msra.mxu0 %v223
  %453 = vmatprep.subr.bf16.mxu0 0
  %454 = vmatpush1.bf16.msra.mxu0 0
  %455 = vmatprep.subr.bf16.mxu0 0
  %456 = vmatpush1.bf16.msra.mxu0 0
  %457 = vmatprep.subr.bf16.mxu0 0
  %458 = vmatpush1.bf16.msra.mxu0 0
  %459 = vmatprep.subr.bf16.mxu0 0
  %460 = vmatpush1.bf16.msra.mxu0 0
  %461 = vmatprep.subr.bf16.mxu0 0
  %462 = vmatpush1.bf16.msra.mxu0 0
  %463 = vmatprep.subr.bf16.mxu0 0
  %464 = vmatpush1.bf16.msra.mxu0 0
  %465 = vmatprep.subr.bf16.mxu0 0
  %466 = vmatpush1.bf16.msra.mxu0 0
  %467 = vmatprep.subr.bf16.mxu0 0
  %468 = vmatpush1.bf16.msra.mxu0 0
  %469 = vmatprep.subr.bf16.mxu0 0
  %470 = vmatpush1.bf16.msra.mxu0 0
  %471 = vmatprep.subr.bf16.mxu0 0
  %472 = vmatpush1.bf16.msra.mxu0 0
  %473 = vmatprep.subr.bf16.mxu0 0
  %474 = vmatpush1.bf16.msra.mxu0 0
  %475 = vmatprep.subr.bf16.mxu0 0
  %476 = vmatpush1.bf16.msra.mxu0 0
  %477 = vmatprep.mubr.bf16.mxu0 0
  %478 = vmatmul.mubr.bf16.gmra.mrb[0].mxu0 %v443
  %v479 = vpop.f32.mrb[0].mxu0
  %v480 = vadd.f32 0.0, %v479
  %v481 = vpop.f32.mrb[0].mxu0
  %v482 = vadd.f32 0.0, %v481
  %v483 = vpop.f32.mrb[0].mxu0
  %v484 = vpop.f32.mrb[0].mxu0
  %485 = vdwg.mxu0
  %v486 = vadd.f32 %v482, %v42
  %v487 = vxor.u32 %v486, 2147483648
  %v488 = vmul.f32 %v487, 1.442695
  %v489 = vpow.pop %v488
  %v490 = vadd.f32 %v489, 1.0
  %v491 = vrcp.pop %v490
  %v492 = vmul.f32 1.0, %v491
  %v493 = vtanh.pop %v486
  %v494 = vmul.f32 %v492, %v400
  %496 = vrot.lane.b32.xlu0 %v493, 64
  %v497 = vpop.permute.xlu0 %496
  %v499 = vmul.f32 %v492, %v497
  %501 = vrot.lane.b32.xlu0 %v499, 32
  %v502 = vpop.permute.xlu0 %501
  %v504 = vadd.f32 %v494, %v502
  %v505 = vtanh.pop %v504
  %507 = vrot.lane.b32.xlu0 %v505, 64
  %v508 = vpop.permute.xlu0 %507
  %v510 = vmul.f32 %v492, %v508
  %v511 = vadd.f32 %v143, %v480
  %v512 = vxor.u32 %v511, 2147483648
  %v513 = vmul.f32 %v512, 1.442695
  %v514 = vpow.pop %v513
  %v515 = vadd.f32 %v514, 1.0
  %v516 = vrcp.pop %v515
  %v517 = vmul.f32 1.0, %v516
  %v518 = vtanh.pop %v511
  %v519 = vmul.f32 %v517, %v425
  %521 = vrot.lane.b32.xlu0 %v518, 64
  %v522 = vpop.permute.xlu0 %521
  %v524 = vmul.f32 %v517, %v522
  %526 = vrot.lane.b32.xlu0 %v524, 32
  %v527 = vpop.permute.xlu0 %526
  %v529 = vadd.f32 %v519, %v527
  %v530 = vtanh.pop %v529
  %532 = vrot.lane.b32.xlu0 %v530, 64
  %v533 = vpop.permute.xlu0 %532
  %v535 = vmul.f32 %v517, %v533
  %537 = vrot.lane.b32.xlu0 %v535, 32
  %v538 = vpop.permute.xlu0 %537
  %541 = vrot.lane.b32.xlu0 %v510, 64
  %v542 = vpop.permute.xlu0 %541
  %v544 = vsel %vm190, %v538, %v542
  %v545 = vpack.c.bf16 %v544, %v544
  %v547 = vsel %vm233, %v545, 0
  %549 = vmatprep.subr.bf16.mxu0 %v218
  %550 = vmatpush1.bf16.msra.mxu0 %v217
  %551 = vmatprep.subr.bf16.mxu0 %v220
  %552 = vmatpush1.bf16.msra.mxu0 %v219
  %553 = vmatprep.subr.bf16.mxu0 %v222
  %554 = vmatpush1.bf16.msra.mxu0 %v221
  %555 = vmatprep.subr.bf16.mxu0 %v224
  %556 = vmatpush1.bf16.msra.mxu0 %v223
  %557 = vmatprep.subr.bf16.mxu0 0
  %558 = vmatpush1.bf16.msra.mxu0 0
  %559 = vmatprep.subr.bf16.mxu0 0
  %560 = vmatpush1.bf16.msra.mxu0 0
  %561 = vmatprep.subr.bf16.mxu0 0
  %562 = vmatpush1.bf16.msra.mxu0 0
  %563 = vmatprep.subr.bf16.mxu0 0
  %564 = vmatpush1.bf16.msra.mxu0 0
  %565 = vmatprep.subr.bf16.mxu0 0
  %566 = vmatpush1.bf16.msra.mxu0 0
  %567 = vmatprep.subr.bf16.mxu0 0
  %568 = vmatpush1.bf16.msra.mxu0 0
  %569 = vmatprep.subr.bf16.mxu0 0
  %570 = vmatpush1.bf16.msra.mxu0 0
  %571 = vmatprep.subr.bf16.mxu0 0
  %572 = vmatpush1.bf16.msra.mxu0 0
  %573 = vmatprep.subr.bf16.mxu0 0
  %574 = vmatpush1.bf16.msra.mxu0 0
  %575 = vmatprep.subr.bf16.mxu0 0
  %576 = vmatpush1.bf16.msra.mxu0 0
  %577 = vmatprep.subr.bf16.mxu0 0
  %578 = vmatpush1.bf16.msra.mxu0 0
  %579 = vmatprep.subr.bf16.mxu0 0
  %580 = vmatpush1.bf16.msra.mxu0 0
  %581 = vmatprep.mubr.bf16.mxu0 0
  %582 = vmatmul.mubr.bf16.gmra.mrb[0].mxu0 %v547
  %v583 = vpop.f32.mrb[0].mxu0
  %v584 = vadd.f32 0.0, %v583
  %v585 = vpop.f32.mrb[0].mxu0
  %v586 = vadd.f32 0.0, %v585
  %v587 = vpop.f32.mrb[0].mxu0
  %v588 = vpop.f32.mrb[0].mxu0
  %589 = vdwg.mxu0
  %v590 = vadd.f32 %v586, %v42
  %v591 = vxor.u32 %v590, 2147483648
  %v592 = vmul.f32 %v591, 1.442695
  %v593 = vpow.pop %v592
  %v594 = vadd.f32 %v593, 1.0
  %v595 = vrcp.pop %v594
  %v596 = vmul.f32 1.0, %v595
  %v597 = vtanh.pop %v590
  %v598 = vmul.f32 %v596, %v504
  %600 = vrot.lane.b32.xlu0 %v597, 64
  %v601 = vpop.permute.xlu0 %600
  %v603 = vmul.f32 %v596, %v601
  %605 = vrot.lane.b32.xlu0 %v603, 32
  %v606 = vpop.permute.xlu0 %605
  %v608 = vadd.f32 %v598, %v606
  %v609 = vtanh.pop %v608
  %611 = vrot.lane.b32.xlu0 %v609, 64
  %v612 = vpop.permute.xlu0 %611
  %v614 = vmul.f32 %v596, %v612
  %v615 = vadd.f32 %v148, %v584
  %v616 = vxor.u32 %v615, 2147483648
  %v617 = vmul.f32 %v616, 1.442695
  %v618 = vpow.pop %v617
  %v619 = vadd.f32 %v618, 1.0
  %v620 = vrcp.pop %v619
  %v621 = vmul.f32 1.0, %v620
  %v622 = vtanh.pop %v615
  %v623 = vmul.f32 %v621, %v529
  %625 = vrot.lane.b32.xlu0 %v622, 64
  %v626 = vpop.permute.xlu0 %625
  %v628 = vmul.f32 %v621, %v626
  %630 = vrot.lane.b32.xlu0 %v628, 32
  %v631 = vpop.permute.xlu0 %630
  %v633 = vadd.f32 %v623, %v631
  %v634 = vtanh.pop %v633
  %636 = vrot.lane.b32.xlu0 %v634, 64
  %v637 = vpop.permute.xlu0 %636
  %v639 = vmul.f32 %v621, %v637
  %641 = vrot.lane.b32.xlu0 %v639, 32
  %v642 = vpop.permute.xlu0 %641
  %645 = vrot.lane.b32.xlu0 %v614, 64
  %v646 = vpop.permute.xlu0 %645
  %v648 = vsel %vm190, %v642, %v646
  %v649 = vpack.c.bf16 %v648, %v648
  %v651 = vsel %vm233, %v649, 0
  %653 = vmatprep.subr.bf16.mxu0 %v218
  %654 = vmatpush1.bf16.msra.mxu0 %v217
  %655 = vmatprep.subr.bf16.mxu0 %v220
  %656 = vmatpush1.bf16.msra.mxu0 %v219
  %657 = vmatprep.subr.bf16.mxu0 %v222
  %658 = vmatpush1.bf16.msra.mxu0 %v221
  %659 = vmatprep.subr.bf16.mxu0 %v224
  %660 = vmatpush1.bf16.msra.mxu0 %v223
  %661 = vmatprep.subr.bf16.mxu0 0
  %662 = vmatpush1.bf16.msra.mxu0 0
  %663 = vmatprep.subr.bf16.mxu0 0
  %664 = vmatpush1.bf16.msra.mxu0 0
  %665 = vmatprep.subr.bf16.mxu0 0
  %666 = vmatpush1.bf16.msra.mxu0 0
  %667 = vmatprep.subr.bf16.mxu0 0
  %668 = vmatpush1.bf16.msra.mxu0 0
  %669 = vmatprep.subr.bf16.mxu0 0
  %670 = vmatpush1.bf16.msra.mxu0 0
  %671 = vmatprep.subr.bf16.mxu0 0
  %672 = vmatpush1.bf16.msra.mxu0 0
  %673 = vmatprep.subr.bf16.mxu0 0
  %674 = vmatpush1.bf16.msra.mxu0 0
  %675 = vmatprep.subr.bf16.mxu0 0
  %676 = vmatpush1.bf16.msra.mxu0 0
  %677 = vmatprep.subr.bf16.mxu0 0
  %678 = vmatpush1.bf16.msra.mxu0 0
  %679 = vmatprep.subr.bf16.mxu0 0
  %680 = vmatpush1.bf16.msra.mxu0 0
  %681 = vmatprep.subr.bf16.mxu0 0
  %682 = vmatpush1.bf16.msra.mxu0 0
  %683 = vmatprep.subr.bf16.mxu0 0
  %684 = vmatpush1.bf16.msra.mxu0 0
  %685 = vmatprep.mubr.bf16.mxu0 0
  %686 = vmatmul.mubr.bf16.gmra.mrb[0].mxu0 %v651
  %v687 = vpop.f32.mrb[0].mxu0
  %v688 = vadd.f32 0.0, %v687
  %v689 = vpop.f32.mrb[0].mxu0
  %v690 = vadd.f32 0.0, %v689
  %v691 = vpop.f32.mrb[0].mxu0
  %v692 = vpop.f32.mrb[0].mxu0
  %693 = vdwg.mxu0
  %v694 = vadd.f32 %v690, %v42
  %v695 = vxor.u32 %v694, 2147483648
  %v696 = vmul.f32 %v695, 1.442695
  %v697 = vpow.pop %v696
  %v698 = vadd.f32 %v697, 1.0
  %v699 = vrcp.pop %v698
  %v700 = vmul.f32 1.0, %v699
  %v701 = vtanh.pop %v694
  %v702 = vmul.f32 %v700, %v608
  %704 = vrot.lane.b32.xlu0 %v701, 64
  %v705 = vpop.permute.xlu0 %704
  %v707 = vmul.f32 %v700, %v705
  %709 = vrot.lane.b32.xlu0 %v707, 32
  %v710 = vpop.permute.xlu0 %709
  %v712 = vadd.f32 %v702, %v710
  %v713 = vtanh.pop %v712
  %715 = vrot.lane.b32.xlu0 %v713, 64
  %v716 = vpop.permute.xlu0 %715
  %v718 = vmul.f32 %v700, %v716
  %v719 = vadd.f32 %v151, %v688
  %v720 = vxor.u32 %v719, 2147483648
  %v721 = vmul.f32 %v720, 1.442695
  %v722 = vpow.pop %v721
  %v723 = vadd.f32 %v722, 1.0
  %v724 = vrcp.pop %v723
  %v725 = vmul.f32 1.0, %v724
  %v726 = vtanh.pop %v719
  %v727 = vmul.f32 %v725, %v633
  %729 = vrot.lane.b32.xlu0 %v726, 64
  %v730 = vpop.permute.xlu0 %729
  %v732 = vmul.f32 %v725, %v730
  %734 = vrot.lane.b32.xlu0 %v732, 32
  %v735 = vpop.permute.xlu0 %734
  %v737 = vadd.f32 %v727, %v735
  %v738 = vtanh.pop %v737
  %740 = vrot.lane.b32.xlu0 %v738, 64
  %v741 = vpop.permute.xlu0 %740
  %v743 = vmul.f32 %v725, %v741
  %745 = vrot.lane.b32.xlu0 %v743, 32
  %v746 = vpop.permute.xlu0 %745
  %749 = vrot.lane.b32.xlu0 %v718, 64
  %v750 = vpop.permute.xlu0 %749
  %v752 = vsel %vm190, %v746, %v750
  %v753 = vpack.c.bf16 %v752, %v752
  %v755 = vsel %vm233, %v753, 0
  %757 = vmatprep.subr.bf16.mxu0 %v218
  %758 = vmatpush1.bf16.msra.mxu0 %v217
  %759 = vmatprep.subr.bf16.mxu0 %v220
  %760 = vmatpush1.bf16.msra.mxu0 %v219
  %761 = vmatprep.subr.bf16.mxu0 %v222
  %762 = vmatpush1.bf16.msra.mxu0 %v221
  %763 = vmatprep.subr.bf16.mxu0 %v224
  %764 = vmatpush1.bf16.msra.mxu0 %v223
  %765 = vmatprep.subr.bf16.mxu0 0
  %766 = vmatpush1.bf16.msra.mxu0 0
  %767 = vmatprep.subr.bf16.mxu0 0
  %768 = vmatpush1.bf16.msra.mxu0 0
  %769 = vmatprep.subr.bf16.mxu0 0
  %770 = vmatpush1.bf16.msra.mxu0 0
  %771 = vmatprep.subr.bf16.mxu0 0
  %772 = vmatpush1.bf16.msra.mxu0 0
  %773 = vmatprep.subr.bf16.mxu0 0
  %774 = vmatpush1.bf16.msra.mxu0 0
  %775 = vmatprep.subr.bf16.mxu0 0
  %776 = vmatpush1.bf16.msra.mxu0 0
  %777 = vmatprep.subr.bf16.mxu0 0
  %778 = vmatpush1.bf16.msra.mxu0 0
  %779 = vmatprep.subr.bf16.mxu0 0
  %780 = vmatpush1.bf16.msra.mxu0 0
  %781 = vmatprep.subr.bf16.mxu0 0
  %782 = vmatpush1.bf16.msra.mxu0 0
  %783 = vmatprep.subr.bf16.mxu0 0
  %784 = vmatpush1.bf16.msra.mxu0 0
  %785 = vmatprep.subr.bf16.mxu0 0
  %786 = vmatpush1.bf16.msra.mxu0 0
  %787 = vmatprep.subr.bf16.mxu0 0
  %788 = vmatpush1.bf16.msra.mxu0 0
  %789 = vmatprep.mubr.bf16.mxu0 0
  %790 = vmatmul.mubr.bf16.gmra.mrb[0].mxu0 %v755
  %v791 = vpop.f32.mrb[0].mxu0
  %v792 = vadd.f32 0.0, %v791
  %v793 = vpop.f32.mrb[0].mxu0
  %v794 = vadd.f32 0.0, %v793
  %v795 = vpop.f32.mrb[0].mxu0
  %v796 = vpop.f32.mrb[0].mxu0
  %797 = vdwg.mxu0
  %v798 = vadd.f32 %v794, %v42
  %v799 = vxor.u32 %v798, 2147483648
  %v800 = vmul.f32 %v799, 1.442695
  %v801 = vpow.pop %v800
  %v802 = vadd.f32 %v801, 1.0
  %v803 = vrcp.pop %v802
  %v804 = vmul.f32 1.0, %v803
  %v805 = vtanh.pop %v798
  %v806 = vmul.f32 %v804, %v712
  %808 = vrot.lane.b32.xlu0 %v805, 64
  %v809 = vpop.permute.xlu0 %808
  %v811 = vmul.f32 %v804, %v809
  %813 = vrot.lane.b32.xlu0 %v811, 32
  %v814 = vpop.permute.xlu0 %813
  %v816 = vadd.f32 %v806, %v814
  %v817 = vtanh.pop %v816
  %819 = vrot.lane.b32.xlu0 %v817, 64
  %v820 = vpop.permute.xlu0 %819
  %v822 = vmul.f32 %v804, %v820
  %v823 = vadd.f32 %v156, %v792
  %v824 = vxor.u32 %v823, 2147483648
  %v825 = vmul.f32 %v824, 1.442695
  %v826 = vpow.pop %v825
  %v827 = vadd.f32 %v826, 1.0
  %v828 = vrcp.pop %v827
  %v829 = vmul.f32 1.0, %v828
  %v830 = vtanh.pop %v823
  %v831 = vmul.f32 %v829, %v737
  %833 = vrot.lane.b32.xlu0 %v830, 64
  %v834 = vpop.permute.xlu0 %833
  %v836 = vmul.f32 %v829, %v834
  %838 = vrot.lane.b32.xlu0 %v836, 32
  %v839 = vpop.permute.xlu0 %838
  %v841 = vadd.f32 %v831, %v839
  %v842 = vtanh.pop %v841
  %844 = vrot.lane.b32.xlu0 %v842, 64
  %v845 = vpop.permute.xlu0 %844
  %v847 = vmul.f32 %v829, %v845
  %849 = vrot.lane.b32.xlu0 %v847, 32
  %v850 = vpop.permute.xlu0 %849
  %853 = vrot.lane.b32.xlu0 %v822, 64
  %v854 = vpop.permute.xlu0 %853
  %v856 = vsel %vm190, %v850, %v854
  %v857 = vpack.c.bf16 %v856, %v856
  %v859 = vsel %vm233, %v857, 0
  %861 = vmatprep.subr.bf16.mxu0 %v218
  %862 = vmatpush1.bf16.msra.mxu0 %v217
  %863 = vmatprep.subr.bf16.mxu0 %v220
  %864 = vmatpush1.bf16.msra.mxu0 %v219
  %865 = vmatprep.subr.bf16.mxu0 %v222
  %866 = vmatpush1.bf16.msra.mxu0 %v221
  %867 = vmatprep.subr.bf16.mxu0 %v224
  %868 = vmatpush1.bf16.msra.mxu0 %v223
  %869 = vmatprep.subr.bf16.mxu0 0
  %870 = vmatpush1.bf16.msra.mxu0 0
  %871 = vmatprep.subr.bf16.mxu0 0
  %872 = vmatpush1.bf16.msra.mxu0 0
  %873 = vmatprep.subr.bf16.mxu0 0
  %874 = vmatpush1.bf16.msra.mxu0 0
  %875 = vmatprep.subr.bf16.mxu0 0
  %876 = vmatpush1.bf16.msra.mxu0 0
  %877 = vmatprep.subr.bf16.mxu0 0
  %878 = vmatpush1.bf16.msra.mxu0 0
  %879 = vmatprep.subr.bf16.mxu0 0
  %880 = vmatpush1.bf16.msra.mxu0 0
  %881 = vmatprep.subr.bf16.mxu0 0
  %882 = vmatpush1.bf16.msra.mxu0 0
  %883 = vmatprep.subr.bf16.mxu0 0
  %884 = vmatpush1.bf16.msra.mxu0 0
  %885 = vmatprep.subr.bf16.mxu0 0
  %886 = vmatpush1.bf16.msra.mxu0 0
  %887 = vmatprep.subr.bf16.mxu0 0
  %888 = vmatpush1.bf16.msra.mxu0 0
  %889 = vmatprep.subr.bf16.mxu0 0
  %890 = vmatpush1.bf16.msra.mxu0 0
  %891 = vmatprep.subr.bf16.mxu0 0
  %892 = vmatpush1.bf16.msra.mxu0 0
  %893 = vmatprep.mubr.bf16.mxu0 0
  %894 = vmatmul.mubr.bf16.gmra.mrb[0].mxu0 %v859
  %v895 = vpop.f32.mrb[0].mxu0
  %v896 = vadd.f32 0.0, %v895
  %v897 = vpop.f32.mrb[0].mxu0
  %v898 = vadd.f32 0.0, %v897
  %v899 = vpop.f32.mrb[0].mxu0
  %v900 = vpop.f32.mrb[0].mxu0
  %901 = vdwg.mxu0
  %v902 = vadd.f32 %v898, %v42
  %v903 = vxor.u32 %v902, 2147483648
  %v904 = vmul.f32 %v903, 1.442695
  %v905 = vpow.pop %v904
  %v906 = vadd.f32 %v905, 1.0
  %v907 = vrcp.pop %v906
  %v908 = vmul.f32 1.0, %v907
  %v909 = vtanh.pop %v902
  %v910 = vmul.f32 %v908, %v816
  %912 = vrot.lane.b32.xlu0 %v909, 64
  %v913 = vpop.permute.xlu0 %912
  %v915 = vmul.f32 %v908, %v913
  %917 = vrot.lane.b32.xlu0 %v915, 32
  %v918 = vpop.permute.xlu0 %917
  %v920 = vadd.f32 %v910, %v918
  %v921 = vtanh.pop %v920
  %923 = vrot.lane.b32.xlu0 %v921, 64
  %v924 = vpop.permute.xlu0 %923
  %v926 = vmul.f32 %v908, %v924
  %v927 = vadd.f32 %v159, %v896
  %v928 = vxor.u32 %v927, 2147483648
  %v929 = vmul.f32 %v928, 1.442695
  %v930 = vpow.pop %v929
  %v931 = vadd.f32 %v930, 1.0
  %v932 = vrcp.pop %v931
  %v933 = vmul.f32 1.0, %v932
  %v934 = vtanh.pop %v927
  %v935 = vmul.f32 %v933, %v841
  %937 = vrot.lane.b32.xlu0 %v934, 64
  %v938 = vpop.permute.xlu0 %937
  %v940 = vmul.f32 %v933, %v938
  %942 = vrot.lane.b32.xlu0 %v940, 32
  %v943 = vpop.permute.xlu0 %942
  %v945 = vadd.f32 %v935, %v943
  %v946 = vtanh.pop %v945
  %948 = vrot.lane.b32.xlu0 %v946, 64
  %v949 = vpop.permute.xlu0 %948
  %v951 = vmul.f32 %v933, %v949
  %953 = vrot.lane.b32.xlu0 %v951, 32
  %v954 = vpop.permute.xlu0 %953
  %957 = vrot.lane.b32.xlu0 %v926, 64
  %v958 = vpop.permute.xlu0 %957
  %v960 = vsel %vm190, %v954, %v958
  %v961 = vpack.c.bf16 %v960, %v960
  %v963 = vsel %vm233, %v961, 0
  %965 = vmatprep.subr.bf16.mxu0 %v218
  %966 = vmatpush1.bf16.msra.mxu0 %v217
  %967 = vmatprep.subr.bf16.mxu0 %v220
  %968 = vmatpush1.bf16.msra.mxu0 %v219
  %969 = vmatprep.subr.bf16.mxu0 %v222
  %970 = vmatpush1.bf16.msra.mxu0 %v221
  %971 = vmatprep.subr.bf16.mxu0 %v224
  %972 = vmatpush1.bf16.msra.mxu0 %v223
  %973 = vmatprep.subr.bf16.mxu0 0
  %974 = vmatpush1.bf16.msra.mxu0 0
  %975 = vmatprep.subr.bf16.mxu0 0
  %976 = vmatpush1.bf16.msra.mxu0 0
  %977 = vmatprep.subr.bf16.mxu0 0
  %978 = vmatpush1.bf16.msra.mxu0 0
  %979 = vmatprep.subr.bf16.mxu0 0
  %980 = vmatpush1.bf16.msra.mxu0 0
  %981 = vmatprep.subr.bf16.mxu0 0
  %982 = vmatpush1.bf16.msra.mxu0 0
  %983 = vmatprep.subr.bf16.mxu0 0
  %984 = vmatpush1.bf16.msra.mxu0 0
  %985 = vmatprep.subr.bf16.mxu0 0
  %986 = vmatpush1.bf16.msra.mxu0 0
  %987 = vmatprep.subr.bf16.mxu0 0
  %988 = vmatpush1.bf16.msra.mxu0 0
  %989 = vmatprep.subr.bf16.mxu0 0
  %990 = vmatpush1.bf16.msra.mxu0 0
  %991 = vmatprep.subr.bf16.mxu0 0
  %992 = vmatpush1.bf16.msra.mxu0 0
  %993 = vmatprep.subr.bf16.mxu0 0
  %994 = vmatpush1.bf16.msra.mxu0 0
  %995 = vmatprep.subr.bf16.mxu0 0
  %996 = vmatpush1.bf16.msra.mxu0 0
  %997 = vmatprep.mubr.bf16.mxu0 0
  %998 = vmatmul.mubr.bf16.gmra.mrb[0].mxu0 %v963
  %v999 = vpop.f32.mrb[0].mxu0
  %v1000 = vpop.f32.mrb[0].mxu0
  %v1001 = vadd.f32 0.0, %v1000
  %v1002 = vpop.f32.mrb[0].mxu0
  %v1003 = vpop.f32.mrb[0].mxu0
  %1004 = vdwg.mxu0
  %v1005 = vadd.f32 %v1001, %v42
  %v1006 = vxor.u32 %v1005, 2147483648
  %v1007 = vmul.f32 %v1006, 1.442695
  %v1008 = vpow.pop %v1007
  %v1009 = vadd.f32 %v1008, 1.0
  %v1010 = vrcp.pop %v1009
  %v1011 = vmul.f32 1.0, %v1010
  %v1012 = vtanh.pop %v1005
  %v1013 = vmul.f32 %v1011, %v920
  %1015 = vrot.lane.b32.xlu0 %v1012, 64
  %v1016 = vpop.permute.xlu0 %1015
  %v1018 = vmul.f32 %v1011, %v1016
  %1020 = vrot.lane.b32.xlu0 %v1018, 32
  %v1021 = vpop.permute.xlu0 %1020
  %v1023 = vadd.f32 %v1013, %v1021
  %v1024 = vtanh.pop %v1023
  %1026 = vrot.lane.b32.xlu0 %v1024, 64
  %v1027 = vpop.permute.xlu0 %1026
  %v1029 = vmul.f32 %v1011, %v1027
  %v1030 = vld [vmem:[%s5] sm:$0x1]
  %v1032 = vlaneseq
  %v1033 = vshrl.u32 %v1032, 7
  %v1034 = vsub.s32 0, %v1033
  %v1035 = vrot.slane %v1030, %v1034
  %1036 = vrot.lane.b32.xlu0 %v1035, 96
  %v1037 = vpop.permute.xlu0 %1036
  %v1039 = vmul.f32 %v1029, %v1037
  %1041 = vrot.lane.b32.xlu0 %v1039, 32
  %v1042 = vpop.permute.xlu0 %1041
  %v1044 = vsel %vm190, %v1042, 0.0
  %1045 = vadd.xlane.f32.xlu0 %v1044
  %v1046 = vpop.xlane.xlu0 %1045
  %v1047 = vld [vmem:[#allocation2] sm:$0x1]
  %v1049 = vlaneseq
  %v1050 = vshrl.u32 %v1049, 7
  %v1051 = vsub.s32 0, %v1050
  %v1052 = vrot.slane %v1047, %v1051
  %v1054 = vadd.f32 %v1046, %v1052
  %vm1055 = vcmask 7168
  %1056 = vst.msk [vmem:[%s7] sm:$0xff] %vm1055, %v1054
  // Predicated region
  $region30: #{demand_forecast.1} parent=0 // pred_check
    _
  $region31: #{demand_forecast.1} parent=0 // pred_check_branch
    %1058 = sbr.rel (0) target = $region33
  $region32: #{demand_forecast.1} parent=0 // pred_region
    _
  $region33: #{demand_forecast.1} parent=0 // pred_fallthru
    _
  // Predicated region
  $region34: #{demand_forecast.1} parent=0 // pred_check
    _
  $region35: #{demand_forecast.1} parent=0 // pred_check_branch
    %1060 = sbr.rel (0) target = $region37
  $region36: #{demand_forecast.1} parent=0 // pred_region
    _
  $region37: #{demand_forecast.1} parent=0 // pred_fallthru
    _

</llo_original>
